<compile_context>
chip_gen: v7x
topology: tpu7x:2x2x1
jax: 0.10.0
libtpu: 0.0.40
codegen_flags: <defaults>
</compile_context>

<pallas_src>
import jax
import jax.numpy as jnp
from jax import lax
from jax.experimental import pallas as pl
from jax.experimental.pallas import tpu as pltpu


# ----------------------------------------------------------------------------
# Pallas kernel: fused  relu(W_conv . patch^T + b)  ->  W_head . t + b_head
# ----------------------------------------------------------------------------
def _rpn_head_kernel(p_ref, wc_ref, bc_ref, wh_ref, bh_ref, out_ref):
    # p_ref : (9C, LB)  bf16 im2col patches, LB = imgs_per_step*H*W (lane-dense)
    # wc_ref: (C, 9C)   bf16 im2col conv3x3 weight (resident across the grid)
    # bc_ref: (C, 1)    f32 conv bias
    # wh_ref: (Mp, C)   bf16 fused [objectness ; anchor_deltas] 1x1 weights
    # bh_ref: (Mp, 1)   f32 fused bias (zero in the pad rows)
    t = jnp.dot(wc_ref[...], p_ref[...],
                preferred_element_type=jnp.float32)            # (C, LB), one K=9C push
    t = jnp.maximum(t + bc_ref[...], 0.0)                      # bias + ReLU, f32 VPU
    out = jnp.dot(wh_ref[...], t.astype(jnp.bfloat16),
                  preferred_element_type=jnp.float32)          # (Mp, LB)
    out_ref[...] = out + bh_ref[...]                           # lane-dense store


def _choose_imgs_per_step(n, hw):
    """Pack images on the lane axis per grid step (weight-stationary).

    Prefer a per-step lane width in [512, 2048] (fat enough to amortize per-step
    overhead and the MXU weight push, small enough for VMEM); among those prefer
    the smallest batch (more grid steps -> v7x megacore / pipelining).  Fall back
    to the whole batch in one step (block == full array, always layout-legal).
    """
    candidates = [b for b in range(1, n + 1)
                  if n % b == 0 and ((b * hw) % 128 == 0 or b == n)]
    good = [b for b in candidates if 512 <= b * hw <= 2048]
    if good:
        return min(good)
    return max(candidates)


def rpn_head_pallas(patch_t, w_col, b_conv, w_head, b_head, *, n_imgs, hw):
    """patch_t: (9C, n_imgs*HW) bf16 im2col patches -> fused (Mp, n_imgs*HW) f32."""
    k9c, total = patch_t.shape
    c = w_col.shape[0]
    mp = w_head.shape[0]
    b = _choose_imgs_per_step(n_imgs, hw)
    lb = b * hw
    steps = total // lb

    return pl.pallas_call(
        _rpn_head_kernel,
        out_shape=jax.ShapeDtypeStruct((mp, total), jnp.float32),
        grid=(steps,),
        in_specs=[
            pl.BlockSpec((k9c, lb), lambda i: (0, i)),     # patches: lane blocks
            pl.BlockSpec((c, k9c), lambda i: (0, 0)),      # weights resident
            pl.BlockSpec((c, 1), lambda i: (0, 0)),
            pl.BlockSpec((mp, c), lambda i: (0, 0)),
            pl.BlockSpec((mp, 1), lambda i: (0, 0)),
        ],
        out_specs=pl.BlockSpec((mp, lb), lambda i: (0, i)),
        compiler_params=pltpu.CompilerParams(
            dimension_semantics=("parallel",),
            # Demo footprint is <1 MiB; 48 MiB is safe on every generation.
            # Retune per generation at production strip sizes (see TODO above).
            vmem_limit_bytes=48 * 1024 * 1024),
    )(patch_t, w_col, b_conv, w_head, b_head)


# ----------------------------------------------------------------------------
# Wrapper: PyTorch-layout params -> kernel layouts, per-level forward
# ----------------------------------------------------------------------------
def _convert_params(wc_oihw, bc, wo_oihw, bo, wd_oihw, bd):
    c = wc_oihw.shape[0]
    a = wo_oihw.shape[0]
    ab = wd_oihw.shape[0]
    m = a + ab
    mp = ((m + 7) // 8) * 8                               # pad 15 -> 16 (full sublane)
    # im2col conv weight: column k = (ky*3 + kx)*C + c_in
    w_col = (jnp.transpose(wc_oihw, (0, 2, 3, 1))
             .reshape(c, 9 * c).astype(jnp.bfloat16))     # (C, 9C)
    b_conv = bc.reshape(c, 1).astype(jnp.float32)
    # fused [objectness ; anchor_deltas] 1x1 weights + bias, zero-padded to Mp rows
    w_head = jnp.concatenate([wo_oihw[:, :, 0, 0], wd_oihw[:, :, 0, 0]], axis=0)
    w_head = jnp.pad(w_head, ((0, mp - m), (0, 0))).astype(jnp.bfloat16)   # (Mp, C)
    b_head = jnp.pad(jnp.concatenate([bo, bd]), (0, mp - m))
    b_head = b_head.reshape(mp, 1).astype(jnp.float32)
    return dict(w_col=w_col, b_conv=b_conv, w_head=w_head, b_head=b_head,
                C=c, A=a, AB=ab, M=m, Mp=mp)


def _rpn_head_level(x_nchw, p):
    """One feature level: x (N, C, H, W) -> (objectness (N,A,H,W), deltas (N,A*4,H,W))."""
    n, c, h, w = x_nchw.shape
    hw = h * w
    # --- wrapper-side im2col (plain XLA): (9C, N*HW) bf16, HW lane-dense ---------
    x_nhwc = jnp.transpose(x_nchw, (0, 2, 3, 1))
    x_pad = jnp.pad(x_nhwc, ((0, 0), (1, 1), (1, 1), (0, 0)))
    taps = [x_pad[:, ky:ky + h, kx:kx + w, :]
            for ky in range(3) for kx in range(3)]        # 9 x (N, H, W, C)
    patch = jnp.stack(taps, axis=-2).reshape(n, hw, 9 * c)        # k = tap*C + c_in
    patch_t = (jnp.transpose(patch, (2, 0, 1))
               .reshape(9 * c, n * hw).astype(jnp.bfloat16))      # (9C, N*HW)

    fused_wide = rpn_head_pallas(patch_t, p["w_col"], p["b_conv"],
                                 p["w_head"], p["b_head"], n_imgs=n, hw=hw)
    fused = jnp.transpose(fused_wide.reshape(p["Mp"], n, hw), (1, 0, 2))   # (N, Mp, HW)
    obj = fused[:, :p["A"], :].reshape(n, p["A"], h, w)
    deltas = fused[:, p["A"]:p["M"], :].reshape(n, p["AB"], h, w)
    return obj, deltas


def standard_rpn_head_forward(features, wc_oihw, bc, wo_oihw, bo, wd_oihw, bd):
    """StandardRPNHead.forward: list of (N,C,Hi,Wi) -> (list of (N,A,Hi,Wi),
    list of (N,A*box_dim,Hi,Wi)). Weights are shared across levels."""
    params = _convert_params(wc_oihw, bc, wo_oihw, bo, wd_oihw, bd)
    pred_objectness_logits, pred_anchor_deltas = [], []
    for x in features:
        o, d = _rpn_head_level(x, params)
        pred_objectness_logits.append(o)
        pred_anchor_deltas.append(d)
    return pred_objectness_logits, pred_anchor_deltas


# ----------------------------------------------------------------------------
if __name__ == "__main__":
    # Small two-level FPN-style input: in_channels=32, num_anchors=3, box_dim=4.
    N, C = 2, 32
    A, BOX = 3, 4
    level_shapes = [(16, 16), (8, 8)]

    key = jax.random.PRNGKey(0)
    k0, k1, k2, k3, k4, k5, k6, k7 = jax.random.split(key, 8)
    features = [jax.random.normal(k, (N, C, h, w), jnp.float32)
                for k, (h, w) in zip((k0, k1), level_shapes)]
    # Synthetic parameters in PyTorch (OIHW) layout.
    wc = jax.random.normal(k2, (C, C, 3, 3), jnp.float32) * 0.05
    bc = jax.random.normal(k3, (C,), jnp.float32) * 0.05
    wo = jax.random.normal(k4, (A, C, 1, 1), jnp.float32) * 0.05
    bo = jax.random.normal(k5, (A,), jnp.float32) * 0.05
    wd = jax.random.normal(k6, (A * BOX, C, 1, 1), jnp.float32) * 0.05
    bd = jax.random.normal(k7, (A * BOX,), jnp.float32) * 0.05

    objs, deltas = standard_rpn_head_forward(features, wc, bc, wo, bo, wd, bd)
    objs = [jax.block_until_ready(o) for o in objs]
    deltas = [jax.block_until_ready(d) for d in deltas]

    # --- correctness check against plain JAX f32 convs ---------------------------
    dn = ("NCHW", "OIHW", "NCHW")
    for x, o_p, d_p, (h, w) in zip(features, objs, deltas, level_shapes):
        t = lax.conv_general_dilated(x, wc, (1, 1), "SAME", dimension_numbers=dn)
        t = jax.nn.relu(t + bc[None, :, None, None])
        o_r = lax.conv_general_dilated(t, wo, (1, 1), "VALID",
                                       dimension_numbers=dn) + bo[None, :, None, None]
        d_r = lax.conv_general_dilated(t, wd, (1, 1), "VALID",
                                       dimension_numbers=dn) + bd[None, :, None, None]
        assert o_p.shape == (N, A, h, w) and d_p.shape == (N, A * BOX, h, w)
        # bf16 MXU operands (f32 accumulation) -> slightly loosened tolerance.
        assert jnp.allclose(o_r, o_p, atol=2e-2, rtol=2e-2)
        assert jnp.allclose(d_r, d_p, atol=2e-2, rtol=2e-2)

    print("KERNEL_OK")
</pallas_src>

<mosaic_0001>
module attributes {stable_mosaic.version = 11 : i64} {
  func.func @_rpn_head_kernel(%arg0: i32, %arg1: memref<288x512xbf16, #tpu.memory_space<vmem>>, %arg2: memref<32x288xbf16, #tpu.memory_space<vmem>>, %arg3: memref<32x1xf32, #tpu.memory_space<vmem>>, %arg4: memref<16x32xbf16, #tpu.memory_space<vmem>>, %arg5: memref<16x1xf32, #tpu.memory_space<vmem>>, %arg6: memref<16x512xf32, #tpu.memory_space<vmem>>) attributes {dimension_semantics = [#tpu.dimension_semantics<parallel>], iteration_bounds = array<i64: 1>, scalar_prefetch = 0 : i64, scratch_operands = 0 : i64, tpu.core_type = #tpu.core_type<tc>, window_params = [{transform_indices = @transform_0, window_bounds = array<i64: 288, 512>}, {pipeline_mode = #tpu.pipeline_mode<synchronous>, transform_indices = @transform_1, window_bounds = array<i64: 32, 288>}, {pipeline_mode = #tpu.pipeline_mode<synchronous>, transform_indices = @transform_2, window_bounds = array<i64: 32, 1>}, {pipeline_mode = #tpu.pipeline_mode<synchronous>, transform_indices = @transform_3, window_bounds = array<i64: 16, 32>}, {pipeline_mode = #tpu.pipeline_mode<synchronous>, transform_indices = @transform_4, window_bounds = array<i64: 16, 1>}, {transform_indices = @transform_5, window_bounds = array<i64: 16, 512>}]} {
    %c0 = arith.constant 0 : index
    %c0_0 = arith.constant 0 : index
    %0 = vector.load %arg2[%c0, %c0_0] : memref<32x288xbf16, #tpu.memory_space<vmem>>, vector<32x288xbf16>
    %c0_1 = arith.constant 0 : index
    %c0_2 = arith.constant 0 : index
    %1 = vector.load %arg1[%c0_1, %c0_2] : memref<288x512xbf16, #tpu.memory_space<vmem>>, vector<288x512xbf16>
    %cst = arith.constant dense<0.000000e+00> : vector<32x512xf32>
    %2 = tpu.matmul %0, %1, %cst {dimension_numbers = #tpu.dot_dimension_numbers<[1], [0], [0], [1], [0, 0, 1, 1], [], []>} : vector<32x288xbf16>, vector<288x512xbf16>, vector<32x512xf32> -> vector<32x512xf32>
    %c0_3 = arith.constant 0 : index
    %c0_4 = arith.constant 0 : index
    %3 = vector.load %arg3[%c0_3, %c0_4] : memref<32x1xf32, #tpu.memory_space<vmem>>, vector<32x1xf32>
    %4 = vector.broadcast %3 : vector<32x1xf32> to vector<32x512xf32>
    %5 = arith.addf %2, %4 : vector<32x512xf32>
    %cst_5 = arith.constant 0.000000e+00 : f32
    %6 = vector.broadcast %cst_5 : f32 to vector<32x512xf32>
    %7 = arith.maximumf %5, %6 : vector<32x512xf32>
    %c0_6 = arith.constant 0 : index
    %c0_7 = arith.constant 0 : index
    %8 = vector.load %arg4[%c0_6, %c0_7] : memref<16x32xbf16, #tpu.memory_space<vmem>>, vector<16x32xbf16>
    %9 = arith.truncf %7 : vector<32x512xf32> to vector<32x512xbf16>
    %cst_8 = arith.constant dense<0.000000e+00> : vector<16x512xf32>
    %10 = tpu.matmul %8, %9, %cst_8 {dimension_numbers = #tpu.dot_dimension_numbers<[1], [0], [0], [1], [0, 0, 1, 1], [], []>} : vector<16x32xbf16>, vector<32x512xbf16>, vector<16x512xf32> -> vector<16x512xf32>
    %c0_9 = arith.constant 0 : index
    %c0_10 = arith.constant 0 : index
    %11 = vector.load %arg5[%c0_9, %c0_10] : memref<16x1xf32, #tpu.memory_space<vmem>>, vector<16x1xf32>
    %12 = vector.broadcast %11 : vector<16x1xf32> to vector<16x512xf32>
    %13 = arith.addf %10, %12 : vector<16x512xf32>
    %c0_11 = arith.constant 0 : index
    %c0_12 = arith.constant 0 : index
    %14 = vector.load %arg6[%c0_11, %c0_12] : memref<16x512xf32, #tpu.memory_space<vmem>>, vector<16x512xf32>
    tpu.vector_store %arg6[%c0_11, %c0_12], %13 {strides = array<i32>} : memref<16x512xf32, #tpu.memory_space<vmem>>, vector<16x512xf32>,
    return
  }
  func.func @transform_0(%arg0: i32) -> (i32, i32) {
    %c0_i32 = arith.constant 0 : i32
    %c0_i32_0 = arith.constant 0 : i32
    return %c0_i32, %arg0 : i32, i32
  }
  func.func @transform_1(%arg0: i32) -> (i32, i32) {
    %c0_i32 = arith.constant 0 : i32
    %c0_i32_0 = arith.constant 0 : i32
    %c0_i32_1 = arith.constant 0 : i32
    return %c0_i32, %c0_i32_0 : i32, i32
  }
  func.func @transform_2(%arg0: i32) -> (i32, i32) {
    %c0_i32 = arith.constant 0 : i32
    %c0_i32_0 = arith.constant 0 : i32
    %c0_i32_1 = arith.constant 0 : i32
    return %c0_i32, %c0_i32_0 : i32, i32
  }
  func.func @transform_3(%arg0: i32) -> (i32, i32) {
    %c0_i32 = arith.constant 0 : i32
    %c0_i32_0 = arith.constant 0 : i32
    %c0_i32_1 = arith.constant 0 : i32
    return %c0_i32, %c0_i32_0 : i32, i32
  }
  func.func @transform_4(%arg0: i32) -> (i32, i32) {
    %c0_i32 = arith.constant 0 : i32
    %c0_i32_0 = arith.constant 0 : i32
    %c0_i32_1 = arith.constant 0 : i32
    return %c0_i32, %c0_i32_0 : i32, i32
  }
  func.func @transform_5(%arg0: i32) -> (i32, i32) {
    %c0_i32 = arith.constant 0 : i32
    %c0_i32_0 = arith.constant 0 : i32
    return %c0_i32, %arg0 : i32, i32
  }
}

</mosaic_0001>

<llo_original>
// kernel: tpu_custom_call.1
$region0: #{tpu_custom_call.1}
  #allocation0 [shape = 'u32[]', space=smem, size = 0x4, offset = 0x4, fixed_abs, tag = 'smem constant byte address 0x4 - core index']
  #allocation1 [shape = 'u32[144,128]{1,0:T(1,128)}', space=vmem, size = 0x12000, scoped, tag = 'internal scratch']
  %s0 = inlined_call_operand.hbm [shape: bf16[288,512], index: 0, kind: input, shape index: {}]
  %s1 = inlined_call_operand.vmem [shape: bf16[32,288], index: 1, kind: input, shape index: {}]
  %s2 = inlined_call_operand.vmem [shape: f32[32,1], index: 2, kind: input, shape index: {}]
  %s3 = inlined_call_operand.vmem [shape: bf16[16,32], index: 3, kind: input, shape index: {}]
  %s4 = inlined_call_operand.vmem [shape: f32[16,1], index: 4, kind: input, shape index: {}]
  %s5 = inlined_call_operand.hbm [shape: f32[16,512], index: 5, kind: output, shape index: {}]
  %s6 = sld [smem:[#allocation0]]
  $region34: #{tpu_custom_call.1} parent=0
    _
  %s8 = ssub.s32 1, %s6
  %s9 = scalar_select 0, %s8, %s6
  $region1: #{tpu_custom_call.1} parent=0
    #allocation2 [shape = 'u8[294912]{0}', space=vmem, size = 0x48000, scoped, tag = 'input window, operand 0, single buffered']
    #allocation3 [shape = 's32[1]{0}', space=sflag, size = 0x4, scoped, tag = 'scoped memory for tpu_custom_call.1']
    #allocation4 [shape = 's32[1]{0}', space=sflag, size = 0x4, scoped, tag = 'scoped memory for tpu_custom_call.1']
    #allocation5 [shape = 'u8[32768]{0}', space=vmem, size = 0x8000, scoped, tag = 'output window, operand 0, single buffered']
    %10 = vsyncpa [#allocation3], 0
    %11 = vsyncpa [#allocation4], 0
    // Predicated region
    $region2: #{tpu_custom_call.1} parent=1 // pred_check
      _
    $region3: #{tpu_custom_call.1} parent=1 // pred_check_branch
      %13 = sbr.rel (0) target = $region5
    $region4: #{tpu_custom_call.1} parent=1 // pred_region
      %s15 = ssub.s32 9216, 9216
      %16 = vsyncadd [#allocation3], %s15
      %s17 = sshll.u32 [#allocation2], 4
      %s18 = int_to_ptr.vmem [resolvable:$true] %s17
      %23 = dma.hbm_to_vmem [thread:$0]  %s0, 9216, %s18, [#allocation3], 256, 256, 16
    $region5: #{tpu_custom_call.1} parent=1 // pred_fallthru
      _
    // Predicated region
    $region6: #{tpu_custom_call.1} parent=1 // pred_check
      _
    $region7: #{tpu_custom_call.1} parent=1 // pred_check_branch
      %25 = sbr.rel (0) target = $region9
    $region8: #{tpu_custom_call.1} parent=1 // pred_region
      _
    $region9: #{tpu_custom_call.1} parent=1 // pred_fallthru
      _
    // Predicated region
    $region10: #{tpu_custom_call.1} parent=1 // pred_check
      _
    $region11: #{tpu_custom_call.1} parent=1 // pred_check_branch
      %27 = sbr.rel (0) target = $region13
    $region12: #{tpu_custom_call.1} parent=1 // pred_region
      _
    $region13: #{tpu_custom_call.1} parent=1 // pred_fallthru
      _
    // Predicated region
    $region14: #{tpu_custom_call.1} parent=1 // pred_check
      _
    $region15: #{tpu_custom_call.1} parent=1 // pred_check_branch
      %29 = sbr.rel (0) target = $region17
    $region16: #{tpu_custom_call.1} parent=1 // pred_region
      _
    $region17: #{tpu_custom_call.1} parent=1 // pred_fallthru
      _
    // Predicated region
    $region18: #{tpu_custom_call.1} parent=1 // pred_check
      _
    $region19: #{tpu_custom_call.1} parent=1 // pred_check_branch
      %31 = sbr.rel (0) target = $region21
    $region20: #{tpu_custom_call.1} parent=1 // pred_region
      _
    $region21: #{tpu_custom_call.1} parent=1 // pred_fallthru
      _
    // Predicated region
    $region22: #{tpu_custom_call.1} parent=1 // pred_check
      _
    $region23: #{tpu_custom_call.1} parent=1 // pred_check_branch
      %33 = sbr.rel (0) target = $region25
    $region24: #{tpu_custom_call.1} parent=1 // pred_region
      %34 = dma.done [#allocation3], 9216
    $region25: #{tpu_custom_call.1} parent=1 // pred_fallthru
      _
    %v36 = vld [vmem:[%s1] sm:$0xff]
    %v37 = vld [vmem:[%s1 + $0x8] sm:$0xf]
    %v38 = vld [vmem:[%s1 + $0xc] sm:$0xff]
    %v39 = vld [vmem:[%s1 + $0x14] sm:$0xf]
    %v40 = vld [vmem:[%s1 + $0x18] sm:$0xff]
    %v41 = vld [vmem:[%s1 + $0x20] sm:$0xf]
    %v42 = vld [vmem:[%s1 + $0x24] sm:$0xff]
    %v43 = vld [vmem:[%s1 + $0x2c] sm:$0xf]
    %v44 = vld [vmem:[#allocation2] sm:$0xff]
    %v45 = vld [vmem:[#allocation2 + $0x8] sm:$0xff]
    %v46 = vld [vmem:[#allocation2 + $0x10] sm:$0xff]
    %v47 = vld [vmem:[#allocation2 + $0x18] sm:$0xff]
    %v48 = vld [vmem:[#allocation2 + $0x20] sm:$0xff]
    %v49 = vld [vmem:[#allocation2 + $0x28] sm:$0xff]
    %v50 = vld [vmem:[#allocation2 + $0x30] sm:$0xff]
    %v51 = vld [vmem:[#allocation2 + $0x38] sm:$0xff]
    %v52 = vld [vmem:[#allocation2 + $0x40] sm:$0xff]
    %v53 = vld [vmem:[#allocation2 + $0x48] sm:$0xff]
    %v54 = vld [vmem:[#allocation2 + $0x50] sm:$0xff]
    %v55 = vld [vmem:[#allocation2 + $0x58] sm:$0xff]
    %v56 = vld [vmem:[#allocation2 + $0x60] sm:$0xff]
    %v57 = vld [vmem:[#allocation2 + $0x68] sm:$0xff]
    %v58 = vld [vmem:[#allocation2 + $0x70] sm:$0xff]
    %v59 = vld [vmem:[#allocation2 + $0x78] sm:$0xff]
    %v60 = vld [vmem:[#allocation2 + $0x80] sm:$0xff]
    %v61 = vld [vmem:[#allocation2 + $0x88] sm:$0xff]
    %v62 = vld [vmem:[#allocation2 + $0x90] sm:$0xff]
    %v63 = vld [vmem:[#allocation2 + $0x98] sm:$0xff]
    %v64 = vld [vmem:[#allocation2 + $0xa0] sm:$0xff]
    %v65 = vld [vmem:[#allocation2 + $0xa8] sm:$0xff]
    %v66 = vld [vmem:[#allocation2 + $0xb0] sm:$0xff]
    %v67 = vld [vmem:[#allocation2 + $0xb8] sm:$0xff]
    %v68 = vld [vmem:[#allocation2 + $0xc0] sm:$0xff]
    %v69 = vld [vmem:[#allocation2 + $0xc8] sm:$0xff]
    %v70 = vld [vmem:[#allocation2 + $0xd0] sm:$0xff]
    %v71 = vld [vmem:[#allocation2 + $0xd8] sm:$0xff]
    %v72 = vld [vmem:[#allocation2 + $0xe0] sm:$0xff]
    %v73 = vld [vmem:[#allocation2 + $0xe8] sm:$0xff]
    %v74 = vld [vmem:[#allocation2 + $0xf0] sm:$0xff]
    %v75 = vld [vmem:[#allocation2 + $0xf8] sm:$0xff]
    %v76 = vld [vmem:[#allocation2 + $0x100] sm:$0xff]
    %v77 = vld [vmem:[#allocation2 + $0x108] sm:$0xff]
    %v78 = vld [vmem:[#allocation2 + $0x110] sm:$0xff]
    %v79 = vld [vmem:[#allocation2 + $0x118] sm:$0xff]
    %v80 = vld [vmem:[#allocation2 + $0x120] sm:$0xff]
    %v81 = vld [vmem:[#allocation2 + $0x128] sm:$0xff]
    %v82 = vld [vmem:[#allocation2 + $0x130] sm:$0xff]
    %v83 = vld [vmem:[#allocation2 + $0x138] sm:$0xff]
    %v84 = vld [vmem:[#allocation2 + $0x140] sm:$0xff]
    %v85 = vld [vmem:[#allocation2 + $0x148] sm:$0xff]
    %v86 = vld [vmem:[#allocation2 + $0x150] sm:$0xff]
    %v87 = vld [vmem:[#allocation2 + $0x158] sm:$0xff]
    %v88 = vld [vmem:[#allocation2 + $0x160] sm:$0xff]
    %v89 = vld [vmem:[#allocation2 + $0x168] sm:$0xff]
    %v90 = vld [vmem:[#allocation2 + $0x170] sm:$0xff]
    %v91 = vld [vmem:[#allocation2 + $0x178] sm:$0xff]
    %v92 = vld [vmem:[#allocation2 + $0x180] sm:$0xff]
    %v93 = vld [vmem:[#allocation2 + $0x188] sm:$0xff]
    %v94 = vld [vmem:[#allocation2 + $0x190] sm:$0xff]
    %v95 = vld [vmem:[#allocation2 + $0x198] sm:$0xff]
    %v96 = vld [vmem:[#allocation2 + $0x1a0] sm:$0xff]
    %v97 = vld [vmem:[#allocation2 + $0x1a8] sm:$0xff]
    %v98 = vld [vmem:[#allocation2 + $0x1b0] sm:$0xff]
    %v99 = vld [vmem:[#allocation2 + $0x1b8] sm:$0xff]
    %v100 = vld [vmem:[#allocation2 + $0x1c0] sm:$0xff]
    %v101 = vld [vmem:[#allocation2 + $0x1c8] sm:$0xff]
    %v102 = vld [vmem:[#allocation2 + $0x1d0] sm:$0xff]
    %v103 = vld [vmem:[#allocation2 + $0x1d8] sm:$0xff]
    %v104 = vld [vmem:[#allocation2 + $0x1e0] sm:$0xff]
    %v105 = vld [vmem:[#allocation2 + $0x1e8] sm:$0xff]
    %v106 = vld [vmem:[#allocation2 + $0x1f0] sm:$0xff]
    %v107 = vld [vmem:[#allocation2 + $0x1f8] sm:$0xff]
    %v108 = vld [vmem:[#allocation2 + $0x200] sm:$0xff]
    %v109 = vld [vmem:[#allocation2 + $0x208] sm:$0xff]
    %v110 = vld [vmem:[#allocation2 + $0x210] sm:$0xff]
    %v111 = vld [vmem:[#allocation2 + $0x218] sm:$0xff]
    %v112 = vld [vmem:[#allocation2 + $0x220] sm:$0xff]
    %v113 = vld [vmem:[#allocation2 + $0x228] sm:$0xff]
    %v114 = vld [vmem:[#allocation2 + $0x230] sm:$0xff]
    %v115 = vld [vmem:[#allocation2 + $0x238] sm:$0xff]
    %v116 = vld [vmem:[%s2] sm:$0xff]
    %v117 = vld [vmem:[%s2 + $0x8] sm:$0xff]
    %v118 = vld [vmem:[%s2 + $0x10] sm:$0xff]
    %v119 = vld [vmem:[%s2 + $0x18] sm:$0xff]
    %121 = vset.pattern.permute.xlu0 0
    %122 = vperm.xlu0 %121, %v116
    %v123 = vpop.permute.xlu0 %122
    %126 = vset.pattern.permute.xlu0 0
    %127 = vperm.xlu0 %126, %v117
    %v128 = vpop.permute.xlu0 %127
    %131 = vset.pattern.permute.xlu0 0
    %132 = vperm.xlu0 %131, %v118
    %v133 = vpop.permute.xlu0 %132
    %136 = vset.pattern.permute.xlu0 0
    %137 = vperm.xlu0 %136, %v119
    %v138 = vpop.permute.xlu0 %137
    %v148 = vunpack.c.l.b16 %v36
    %v149 = vunpack.c.h.b16 %v36
    %v150 = vunpack.c.l.b16 %v37
    %v151 = vunpack.c.l.b16 %v38
    %v152 = vunpack.c.h.b16 %v38
    %v153 = vunpack.c.l.b16 %v39
    %v154 = vunpack.c.l.b16 %v40
    %v155 = vunpack.c.h.b16 %v40
    %v156 = vunpack.c.l.b16 %v41
    %v157 = vunpack.c.l.b16 %v42
    %v158 = vunpack.c.h.b16 %v42
    %v159 = vunpack.c.l.b16 %v43
    %v160 = vpack.c.b16 %v151, %v148
    %v161 = vpack.c.b16 %v152, %v149
    %v162 = vpack.c.b16 %v153, %v150
    %v163 = vpack.c.b16 %v157, %v154
    %v164 = vpack.c.b16 %v158, %v155
    %v165 = vpack.c.b16 %v159, %v156
    %v242 = vunpack.c.l.b16 %v44
    %v243 = vunpack.c.h.b16 %v44
    %v244 = vunpack.c.l.b16 %v45
    %v245 = vunpack.c.h.b16 %v45
    %v246 = vunpack.c.l.b16 %v46
    %v247 = vunpack.c.h.b16 %v46
    %v248 = vunpack.c.l.b16 %v47
    %v249 = vunpack.c.h.b16 %v47
    %v250 = vunpack.c.l.b16 %v48
    %v251 = vunpack.c.h.b16 %v48
    %v252 = vunpack.c.l.b16 %v49
    %v253 = vunpack.c.h.b16 %v49
    %v254 = vunpack.c.l.b16 %v50
    %v255 = vunpack.c.h.b16 %v50
    %v256 = vunpack.c.l.b16 %v51
    %v257 = vunpack.c.h.b16 %v51
    %v258 = vunpack.c.l.b16 %v52
    %v259 = vunpack.c.h.b16 %v52
    %v260 = vunpack.c.l.b16 %v53
    %v261 = vunpack.c.h.b16 %v53
    %v262 = vunpack.c.l.b16 %v54
    %v263 = vunpack.c.h.b16 %v54
    %v264 = vunpack.c.l.b16 %v55
    %v265 = vunpack.c.h.b16 %v55
    %v266 = vunpack.c.l.b16 %v56
    %v267 = vunpack.c.h.b16 %v56
    %v268 = vunpack.c.l.b16 %v57
    %v269 = vunpack.c.h.b16 %v57
    %v270 = vunpack.c.l.b16 %v58
    %v271 = vunpack.c.h.b16 %v58
    %v272 = vunpack.c.l.b16 %v59
    %v273 = vunpack.c.h.b16 %v59
    %v274 = vunpack.c.l.b16 %v60
    %v275 = vunpack.c.h.b16 %v60
    %v276 = vunpack.c.l.b16 %v61
    %v277 = vunpack.c.h.b16 %v61
    %v278 = vunpack.c.l.b16 %v62
    %v279 = vunpack.c.h.b16 %v62
    %v280 = vunpack.c.l.b16 %v63
    %v281 = vunpack.c.h.b16 %v63
    %v282 = vunpack.c.l.b16 %v64
    %v283 = vunpack.c.h.b16 %v64
    %v284 = vunpack.c.l.b16 %v65
    %v285 = vunpack.c.h.b16 %v65
    %v286 = vunpack.c.l.b16 %v66
    %v287 = vunpack.c.h.b16 %v66
    %v288 = vunpack.c.l.b16 %v67
    %v289 = vunpack.c.h.b16 %v67
    %v290 = vunpack.c.l.b16 %v68
    %v291 = vunpack.c.h.b16 %v68
    %v292 = vunpack.c.l.b16 %v69
    %v293 = vunpack.c.h.b16 %v69
    %v294 = vunpack.c.l.b16 %v70
    %v295 = vunpack.c.h.b16 %v70
    %v296 = vunpack.c.l.b16 %v71
    %v297 = vunpack.c.h.b16 %v71
    %v298 = vunpack.c.l.b16 %v72
    %v299 = vunpack.c.h.b16 %v72
    %v300 = vunpack.c.l.b16 %v73
    %v301 = vunpack.c.h.b16 %v73
    %v302 = vunpack.c.l.b16 %v74
    %v303 = vunpack.c.h.b16 %v74
    %v304 = vunpack.c.l.b16 %v75
    %v305 = vunpack.c.h.b16 %v75
    %v306 = vunpack.c.l.b16 %v76
    %v307 = vunpack.c.h.b16 %v76
    %v308 = vunpack.c.l.b16 %v77
    %v309 = vunpack.c.h.b16 %v77
    %v310 = vunpack.c.l.b16 %v78
    %v311 = vunpack.c.h.b16 %v78
    %v312 = vunpack.c.l.b16 %v79
    %v313 = vunpack.c.h.b16 %v79
    %v314 = vunpack.c.l.b16 %v80
    %v315 = vunpack.c.h.b16 %v80
    %v316 = vunpack.c.l.b16 %v81
    %v317 = vunpack.c.h.b16 %v81
    %v318 = vunpack.c.l.b16 %v82
    %v319 = vunpack.c.h.b16 %v82
    %v320 = vunpack.c.l.b16 %v83
    %v321 = vunpack.c.h.b16 %v83
    %v322 = vunpack.c.l.b16 %v84
    %v323 = vunpack.c.h.b16 %v84
    %v324 = vunpack.c.l.b16 %v85
    %v325 = vunpack.c.h.b16 %v85
    %v326 = vunpack.c.l.b16 %v86
    %v327 = vunpack.c.h.b16 %v86
    %v328 = vunpack.c.l.b16 %v87
    %v329 = vunpack.c.h.b16 %v87
    %v330 = vunpack.c.l.b16 %v88
    %v331 = vunpack.c.h.b16 %v88
    %v332 = vunpack.c.l.b16 %v89
    %v333 = vunpack.c.h.b16 %v89
    %v334 = vunpack.c.l.b16 %v90
    %v335 = vunpack.c.h.b16 %v90
    %v336 = vunpack.c.l.b16 %v91
    %v337 = vunpack.c.h.b16 %v91
    %v338 = vunpack.c.l.b16 %v92
    %v339 = vunpack.c.h.b16 %v92
    %v340 = vunpack.c.l.b16 %v93
    %v341 = vunpack.c.h.b16 %v93
    %v342 = vunpack.c.l.b16 %v94
    %v343 = vunpack.c.h.b16 %v94
    %v344 = vunpack.c.l.b16 %v95
    %v345 = vunpack.c.h.b16 %v95
    %v346 = vunpack.c.l.b16 %v96
    %v347 = vunpack.c.h.b16 %v96
    %v348 = vunpack.c.l.b16 %v97
    %v349 = vunpack.c.h.b16 %v97
    %v350 = vunpack.c.l.b16 %v98
    %v351 = vunpack.c.h.b16 %v98
    %v352 = vunpack.c.l.b16 %v99
    %v353 = vunpack.c.h.b16 %v99
    %v354 = vunpack.c.l.b16 %v100
    %v355 = vunpack.c.h.b16 %v100
    %v356 = vunpack.c.l.b16 %v101
    %v357 = vunpack.c.h.b16 %v101
    %v358 = vunpack.c.l.b16 %v102
    %v359 = vunpack.c.h.b16 %v102
    %v360 = vunpack.c.l.b16 %v103
    %v361 = vunpack.c.h.b16 %v103
    %v362 = vunpack.c.l.b16 %v104
    %v363 = vunpack.c.h.b16 %v104
    %v364 = vunpack.c.l.b16 %v105
    %v365 = vunpack.c.h.b16 %v105
    %v366 = vunpack.c.l.b16 %v106
    %v367 = vunpack.c.h.b16 %v106
    %v368 = vunpack.c.l.b16 %v107
    %v369 = vunpack.c.h.b16 %v107
    %v370 = vunpack.c.l.b16 %v108
    %v371 = vunpack.c.h.b16 %v108
    %v372 = vunpack.c.l.b16 %v109
    %v373 = vunpack.c.h.b16 %v109
    %v374 = vunpack.c.l.b16 %v110
    %v375 = vunpack.c.h.b16 %v110
    %v376 = vunpack.c.l.b16 %v111
    %v377 = vunpack.c.h.b16 %v111
    %v378 = vunpack.c.l.b16 %v112
    %v379 = vunpack.c.h.b16 %v112
    %v380 = vunpack.c.l.b16 %v113
    %v381 = vunpack.c.h.b16 %v113
    %v382 = vunpack.c.l.b16 %v114
    %v383 = vunpack.c.h.b16 %v114
    %v384 = vunpack.c.l.b16 %v115
    %v385 = vunpack.c.h.b16 %v115
    %v386 = vpack.c.b16 %v246, %v242
    %v387 = vpack.c.b16 %v247, %v243
    %v388 = vpack.c.b16 %v248, %v244
    %v389 = vpack.c.b16 %v249, %v245
    %v390 = vpack.c.b16 %v254, %v250
    %v391 = vpack.c.b16 %v255, %v251
    %v392 = vpack.c.b16 %v256, %v252
    %v393 = vpack.c.b16 %v257, %v253
    %v394 = vpack.c.b16 %v262, %v258
    %v395 = vpack.c.b16 %v263, %v259
    %v396 = vpack.c.b16 %v264, %v260
    %v397 = vpack.c.b16 %v265, %v261
    %v398 = vpack.c.b16 %v270, %v266
    %v399 = vpack.c.b16 %v271, %v267
    %v400 = vpack.c.b16 %v272, %v268
    %v401 = vpack.c.b16 %v273, %v269
    %v402 = vpack.c.b16 %v278, %v274
    %v403 = vpack.c.b16 %v279, %v275
    %v404 = vpack.c.b16 %v280, %v276
    %v405 = vpack.c.b16 %v281, %v277
    %v406 = vpack.c.b16 %v286, %v282
    %v407 = vpack.c.b16 %v287, %v283
    %v408 = vpack.c.b16 %v288, %v284
    %v409 = vpack.c.b16 %v289, %v285
    %v410 = vpack.c.b16 %v294, %v290
    %v411 = vpack.c.b16 %v295, %v291
    %v412 = vpack.c.b16 %v296, %v292
    %v413 = vpack.c.b16 %v297, %v293
    %v414 = vpack.c.b16 %v302, %v298
    %v415 = vpack.c.b16 %v303, %v299
    %v416 = vpack.c.b16 %v304, %v300
    %v417 = vpack.c.b16 %v305, %v301
    %v418 = vpack.c.b16 %v310, %v306
    %v419 = vpack.c.b16 %v311, %v307
    %v420 = vpack.c.b16 %v312, %v308
    %v421 = vpack.c.b16 %v313, %v309
    %v422 = vpack.c.b16 %v318, %v314
    %v423 = vpack.c.b16 %v319, %v315
    %v424 = vpack.c.b16 %v320, %v316
    %v425 = vpack.c.b16 %v321, %v317
    %v426 = vpack.c.b16 %v326, %v322
    %v427 = vpack.c.b16 %v327, %v323
    %v428 = vpack.c.b16 %v328, %v324
    %v429 = vpack.c.b16 %v329, %v325
    %v430 = vpack.c.b16 %v334, %v330
    %v431 = vpack.c.b16 %v335, %v331
    %v432 = vpack.c.b16 %v336, %v332
    %v433 = vpack.c.b16 %v337, %v333
    %v434 = vpack.c.b16 %v342, %v338
    %v435 = vpack.c.b16 %v343, %v339
    %v436 = vpack.c.b16 %v344, %v340
    %v437 = vpack.c.b16 %v345, %v341
    %v438 = vpack.c.b16 %v350, %v346
    %v439 = vpack.c.b16 %v351, %v347
    %v440 = vpack.c.b16 %v352, %v348
    %v441 = vpack.c.b16 %v353, %v349
    %v442 = vpack.c.b16 %v358, %v354
    %v443 = vpack.c.b16 %v359, %v355
    %v444 = vpack.c.b16 %v360, %v356
    %v445 = vpack.c.b16 %v361, %v357
    %v446 = vpack.c.b16 %v366, %v362
    %v447 = vpack.c.b16 %v367, %v363
    %v448 = vpack.c.b16 %v368, %v364
    %v449 = vpack.c.b16 %v369, %v365
    %v450 = vpack.c.b16 %v374, %v370
    %v451 = vpack.c.b16 %v375, %v371
    %v452 = vpack.c.b16 %v376, %v372
    %v453 = vpack.c.b16 %v377, %v373
    %v454 = vpack.c.b16 %v382, %v378
    %v455 = vpack.c.b16 %v383, %v379
    %v456 = vpack.c.b16 %v384, %v380
    %v457 = vpack.c.b16 %v385, %v381
    %vm530 = vcmask 261120
    %v532 = vsel %vm530, %v162, 0
    %v535 = vsel %vm530, %v165, 0
    %537 = vmatprep.subr.bf16.mxu0 %v387
    %538 = vmatpush1.bf16.msra.mxu0 %v386
    %539 = vmatprep.subr.bf16.mxu0 %v391
    %540 = vmatpush1.bf16.msra.mxu0 %v390
    %541 = vmatprep.subr.bf16.mxu0 %v395
    %542 = vmatpush1.bf16.msra.mxu0 %v394
    %543 = vmatprep.subr.bf16.mxu0 %v399
    %544 = vmatpush1.bf16.msra.mxu0 %v398
    %545 = vmatprep.subr.bf16.mxu0 %v403
    %546 = vmatpush1.bf16.msra.mxu0 %v402
    %547 = vmatprep.subr.bf16.mxu0 %v407
    %548 = vmatpush1.bf16.msra.mxu0 %v406
    %549 = vmatprep.subr.bf16.mxu0 %v411
    %550 = vmatpush1.bf16.msra.mxu0 %v410
    %551 = vmatprep.subr.bf16.mxu0 %v415
    %552 = vmatpush1.bf16.msra.mxu0 %v414
    %553 = vmatprep.subr.bf16.mxu0 %v419
    %554 = vmatpush1.bf16.msra.mxu0 %v418
    %555 = vmatprep.subr.bf16.mxu0 %v423
    %556 = vmatpush1.bf16.msra.mxu0 %v422
    %557 = vmatprep.subr.bf16.mxu0 %v427
    %558 = vmatpush1.bf16.msra.mxu0 %v426
    %559 = vmatprep.subr.bf16.mxu0 %v431
    %560 = vmatpush1.bf16.msra.mxu0 %v430
    %561 = vmatprep.subr.bf16.mxu0 %v435
    %562 = vmatpush1.bf16.msra.mxu0 %v434
    %563 = vmatprep.subr.bf16.mxu0 %v439
    %564 = vmatpush1.bf16.msra.mxu0 %v438
    %565 = vmatprep.subr.bf16.mxu0 %v443
    %566 = vmatpush1.bf16.msra.mxu0 %v442
    %567 = vmatprep.subr.bf16.mxu0 %v447
    %568 = vmatpush1.bf16.msra.mxu0 %v446
    %569 = vmatprep.mubr.bf16.mxu0 %v161
    %570 = vmatmul.mubr.bf16.gmra.mrb[0].mxu0 %v160
    %v571 = vpop.f32.mrb[0].mxu0
    %v572 = vadd.f32 %v123, %v571
    %v573 = vpop.f32.mrb[0].mxu0
    %v574 = vadd.f32 %v123, %v573
    %v575 = vpop.f32.mrb[0].mxu0
    %v576 = vadd.f32 %v128, %v575
    %v577 = vpop.f32.mrb[0].mxu0
    %v578 = vadd.f32 %v128, %v577
    %579 = vmatprep.mubr.bf16.mxu0 %v164
    %580 = vmatmul.mubr.bf16.gmra.mrb[0].mxu0 %v163
    %v581 = vpop.f32.mrb[0].mxu0
    %v582 = vadd.f32 %v133, %v581
    %v583 = vpop.f32.mrb[0].mxu0
    %v584 = vadd.f32 %v133, %v583
    %v585 = vpop.f32.mrb[0].mxu0
    %v586 = vadd.f32 %v138, %v585
    %v587 = vpop.f32.mrb[0].mxu0
    %v588 = vadd.f32 %v138, %v587
    %589 = vdwg.mxu0
    %590 = vmatprep.subr.bf16.mxu0 %v451
    %591 = vmatpush1.bf16.msra.mxu0 %v450
    %592 = vmatprep.subr.bf16.mxu0 %v455
    %593 = vmatpush1.bf16.msra.mxu0 %v454
    %594 = vmatprep.subr.bf16.mxu0 0
    %595 = vmatpush1.bf16.msra.mxu0 0
    %596 = vmatprep.subr.bf16.mxu0 0
    %597 = vmatpush1.bf16.msra.mxu0 0
    %598 = vmatprep.subr.bf16.mxu0 0
    %599 = vmatpush1.bf16.msra.mxu0 0
    %600 = vmatprep.subr.bf16.mxu0 0
    %601 = vmatpush1.bf16.msra.mxu0 0
    %602 = vmatprep.subr.bf16.mxu0 0
    %603 = vmatpush1.bf16.msra.mxu0 0
    %604 = vmatprep.subr.bf16.mxu0 0
    %605 = vmatpush1.bf16.msra.mxu0 0
    %606 = vmatprep.subr.bf16.mxu0 0
    %607 = vmatpush1.bf16.msra.mxu0 0
    %608 = vmatprep.subr.bf16.mxu0 0
    %609 = vmatpush1.bf16.msra.mxu0 0
    %610 = vmatprep.subr.bf16.mxu0 0
    %611 = vmatpush1.bf16.msra.mxu0 0
    %612 = vmatprep.subr.bf16.mxu0 0
    %613 = vmatpush1.bf16.msra.mxu0 0
    %614 = vmatprep.subr.bf16.mxu0 0
    %615 = vmatpush1.bf16.msra.mxu0 0
    %616 = vmatprep.subr.bf16.mxu0 0
    %617 = vmatpush1.bf16.msra.mxu0 0
    %618 = vmatprep.subr.bf16.mxu0 0
    %619 = vmatpush1.bf16.msra.mxu0 0
    %620 = vmatprep.subr.bf16.mxu0 0
    %621 = vmatpush1.bf16.msra.mxu0 0
    %622 = vmatprep.mubr.bf16.mxu0 0
    %623 = vmatmul.mubr.bf16.gmra.mrb[0].mxu0 %v532
    %v624 = vpop.f32.mrb[0].mxu0
    %v625 = vadd.f32 %v572, %v624
    %v626 = vpop.f32.mrb[0].mxu0
    %v627 = vadd.f32 %v574, %v626
    %v628 = vpop.f32.mrb[0].mxu0
    %v629 = vadd.f32 %v576, %v628
    %v630 = vpop.f32.mrb[0].mxu0
    %v631 = vadd.f32 %v578, %v630
    %632 = vmatprep.mubr.bf16.mxu0 0
    %633 = vmatmul.mubr.bf16.gmra.mrb[0].mxu0 %v535
    %v634 = vpop.f32.mrb[0].mxu0
    %v635 = vadd.f32 %v582, %v634
    %v636 = vpop.f32.mrb[0].mxu0
    %v637 = vadd.f32 %v584, %v636
    %v638 = vpop.f32.mrb[0].mxu0
    %v639 = vadd.f32 %v586, %v638
    %v640 = vpop.f32.mrb[0].mxu0
    %v641 = vadd.f32 %v588, %v640
    %642 = vdwg.mxu0
    %643 = vmatprep.subr.bf16.mxu0 %v389
    %644 = vmatpush1.bf16.msra.mxu0 %v388
    %645 = vmatprep.subr.bf16.mxu0 %v393
    %646 = vmatpush1.bf16.msra.mxu0 %v392
    %647 = vmatprep.subr.bf16.mxu0 %v397
    %648 = vmatpush1.bf16.msra.mxu0 %v396
    %649 = vmatprep.subr.bf16.mxu0 %v401
    %650 = vmatpush1.bf16.msra.mxu0 %v400
    %651 = vmatprep.subr.bf16.mxu0 %v405
    %652 = vmatpush1.bf16.msra.mxu0 %v404
    %653 = vmatprep.subr.bf16.mxu0 %v409
    %654 = vmatpush1.bf16.msra.mxu0 %v408
    %655 = vmatprep.subr.bf16.mxu0 %v413
    %656 = vmatpush1.bf16.msra.mxu0 %v412
    %657 = vmatprep.subr.bf16.mxu0 %v417
    %658 = vmatpush1.bf16.msra.mxu0 %v416
    %659 = vmatprep.subr.bf16.mxu0 %v421
    %660 = vmatpush1.bf16.msra.mxu0 %v420
    %661 = vmatprep.subr.bf16.mxu0 %v425
    %662 = vmatpush1.bf16.msra.mxu0 %v424
    %663 = vmatprep.subr.bf16.mxu0 %v429
    %664 = vmatpush1.bf16.msra.mxu0 %v428
    %665 = vmatprep.subr.bf16.mxu0 %v433
    %666 = vmatpush1.bf16.msra.mxu0 %v432
    %667 = vmatprep.subr.bf16.mxu0 %v437
    %668 = vmatpush1.bf16.msra.mxu0 %v436
    %669 = vmatprep.subr.bf16.mxu0 %v441
    %670 = vmatpush1.bf16.msra.mxu0 %v440
    %671 = vmatprep.subr.bf16.mxu0 %v445
    %672 = vmatpush1.bf16.msra.mxu0 %v444
    %673 = vmatprep.subr.bf16.mxu0 %v449
    %674 = vmatpush1.bf16.msra.mxu0 %v448
    %675 = vmatprep.mubr.bf16.mxu0 %v161
    %676 = vmatmul.mubr.bf16.gmra.mrb[0].mxu0 %v160
    %v677 = vpop.f32.mrb[0].mxu0
    %v678 = vadd.f32 %v123, %v677
    %v679 = vpop.f32.mrb[0].mxu0
    %v680 = vadd.f32 %v123, %v679
    %v681 = vpop.f32.mrb[0].mxu0
    %v682 = vadd.f32 %v128, %v681
    %v683 = vpop.f32.mrb[0].mxu0
    %v684 = vadd.f32 %v128, %v683
    %685 = vmatprep.mubr.bf16.mxu0 %v164
    %686 = vmatmul.mubr.bf16.gmra.mrb[0].mxu0 %v163
    %v687 = vpop.f32.mrb[0].mxu0
    %v688 = vadd.f32 %v133, %v687
    %v689 = vpop.f32.mrb[0].mxu0
    %v690 = vadd.f32 %v133, %v689
    %v691 = vpop.f32.mrb[0].mxu0
    %v692 = vadd.f32 %v138, %v691
    %v693 = vpop.f32.mrb[0].mxu0
    %v694 = vadd.f32 %v138, %v693
    %695 = vdwg.mxu0
    %696 = vmatprep.subr.bf16.mxu0 %v453
    %697 = vmatpush1.bf16.msra.mxu0 %v452
    %698 = vmatprep.subr.bf16.mxu0 %v457
    %699 = vmatpush1.bf16.msra.mxu0 %v456
    %700 = vmatprep.subr.bf16.mxu0 0
    %701 = vmatpush1.bf16.msra.mxu0 0
    %702 = vmatprep.subr.bf16.mxu0 0
    %703 = vmatpush1.bf16.msra.mxu0 0
    %704 = vmatprep.subr.bf16.mxu0 0
    %705 = vmatpush1.bf16.msra.mxu0 0
    %706 = vmatprep.subr.bf16.mxu0 0
    %707 = vmatpush1.bf16.msra.mxu0 0
    %708 = vmatprep.subr.bf16.mxu0 0
    %709 = vmatpush1.bf16.msra.mxu0 0
    %710 = vmatprep.subr.bf16.mxu0 0
    %711 = vmatpush1.bf16.msra.mxu0 0
    %712 = vmatprep.subr.bf16.mxu0 0
    %713 = vmatpush1.bf16.msra.mxu0 0
    %714 = vmatprep.subr.bf16.mxu0 0
    %715 = vmatpush1.bf16.msra.mxu0 0
    %716 = vmatprep.subr.bf16.mxu0 0
    %717 = vmatpush1.bf16.msra.mxu0 0
    %718 = vmatprep.subr.bf16.mxu0 0
    %719 = vmatpush1.bf16.msra.mxu0 0
    %720 = vmatprep.subr.bf16.mxu0 0
    %721 = vmatpush1.bf16.msra.mxu0 0
    %722 = vmatprep.subr.bf16.mxu0 0
    %723 = vmatpush1.bf16.msra.mxu0 0
    %724 = vmatprep.subr.bf16.mxu0 0
    %725 = vmatpush1.bf16.msra.mxu0 0
    %726 = vmatprep.subr.bf16.mxu0 0
    %727 = vmatpush1.bf16.msra.mxu0 0
    %728 = vmatprep.mubr.bf16.mxu0 0
    %729 = vmatmul.mubr.bf16.gmra.mrb[0].mxu0 %v532
    %v730 = vpop.f32.mrb[0].mxu0
    %v731 = vadd.f32 %v678, %v730
    %v732 = vpop.f32.mrb[0].mxu0
    %v733 = vadd.f32 %v680, %v732
    %v734 = vpop.f32.mrb[0].mxu0
    %v735 = vadd.f32 %v682, %v734
    %v736 = vpop.f32.mrb[0].mxu0
    %v737 = vadd.f32 %v684, %v736
    %738 = vmatprep.mubr.bf16.mxu0 0
    %739 = vmatmul.mubr.bf16.gmra.mrb[0].mxu0 %v535
    %v740 = vpop.f32.mrb[0].mxu0
    %v741 = vadd.f32 %v688, %v740
    %v742 = vpop.f32.mrb[0].mxu0
    %v743 = vadd.f32 %v690, %v742
    %v744 = vpop.f32.mrb[0].mxu0
    %v745 = vadd.f32 %v692, %v744
    %v746 = vpop.f32.mrb[0].mxu0
    %v747 = vadd.f32 %v694, %v746
    %748 = vdwg.mxu0
    %v749 = vmax.f32 %v625, 0.0
    %v750 = vmax.f32 %v627, 0.0
    %v751 = vmax.f32 %v731, 0.0
    %v752 = vmax.f32 %v733, 0.0
    %v753 = vmax.f32 %v629, 0.0
    %v754 = vmax.f32 %v631, 0.0
    %v755 = vmax.f32 %v735, 0.0
    %v756 = vmax.f32 %v737, 0.0
    %v757 = vmax.f32 %v635, 0.0
    %v758 = vmax.f32 %v637, 0.0
    %v759 = vmax.f32 %v741, 0.0
    %v760 = vmax.f32 %v743, 0.0
    %v761 = vmax.f32 %v639, 0.0
    %v762 = vmax.f32 %v641, 0.0
    %v763 = vmax.f32 %v745, 0.0
    %v764 = vmax.f32 %v747, 0.0
    %v765 = vld [vmem:[%s3] sm:$0xf]
    %v766 = vld [vmem:[%s3 + $0x4] sm:$0xf]
    %v767 = vpack.c.bf16 %v753, %v749
    %v768 = vpack.c.bf16 %v754, %v750
    %v769 = vpack.c.bf16 %v755, %v751
    %v770 = vpack.c.bf16 %v756, %v752
    %v771 = vpack.c.bf16 %v761, %v757
    %v772 = vpack.c.bf16 %v762, %v758
    %v773 = vpack.c.bf16 %v763, %v759
    %v774 = vpack.c.bf16 %v764, %v760
    %v775 = vld [vmem:[%s4] sm:$0xff]
    %v776 = vld [vmem:[%s4 + $0x8] sm:$0xff]
    %778 = vset.pattern.permute.xlu0 0
    %779 = vperm.xlu0 %778, %v775
    %v780 = vpop.permute.xlu0 %779
    %783 = vset.pattern.permute.xlu0 0
    %784 = vperm.xlu0 %783, %v776
    %v785 = vpop.permute.xlu0 %784
    %v789 = vunpack.c.l.b16 %v765
    %v790 = vunpack.c.l.b16 %v766
    %v791 = vpack.c.b16 %v790, %v789
    %v793 = vsel %vm530, %v791, 0
    %795 = vmatprep.subr.bf16.mxu0 %v768
    %796 = vmatpush1.bf16.msra.mxu0 %v767
    %797 = vmatprep.subr.bf16.mxu0 %v772
    %798 = vmatpush1.bf16.msra.mxu0 %v771
    %799 = vmatprep.subr.bf16.mxu0 0
    %800 = vmatpush1.bf16.msra.mxu0 0
    %801 = vmatprep.subr.bf16.mxu0 0
    %802 = vmatpush1.bf16.msra.mxu0 0
    %803 = vmatprep.subr.bf16.mxu0 0
    %804 = vmatpush1.bf16.msra.mxu0 0
    %805 = vmatprep.subr.bf16.mxu0 0
    %806 = vmatpush1.bf16.msra.mxu0 0
    %807 = vmatprep.subr.bf16.mxu0 0
    %808 = vmatpush1.bf16.msra.mxu0 0
    %809 = vmatprep.subr.bf16.mxu0 0
    %810 = vmatpush1.bf16.msra.mxu0 0
    %811 = vmatprep.subr.bf16.mxu0 0
    %812 = vmatpush1.bf16.msra.mxu0 0
    %813 = vmatprep.subr.bf16.mxu0 0
    %814 = vmatpush1.bf16.msra.mxu0 0
    %815 = vmatprep.subr.bf16.mxu0 0
    %816 = vmatpush1.bf16.msra.mxu0 0
    %817 = vmatprep.subr.bf16.mxu0 0
    %818 = vmatpush1.bf16.msra.mxu0 0
    %819 = vmatprep.subr.bf16.mxu0 0
    %820 = vmatpush1.bf16.msra.mxu0 0
    %821 = vmatprep.subr.bf16.mxu0 0
    %822 = vmatpush1.bf16.msra.mxu0 0
    %823 = vmatprep.subr.bf16.mxu0 0
    %824 = vmatpush1.bf16.msra.mxu0 0
    %825 = vmatprep.subr.bf16.mxu0 0
    %826 = vmatpush1.bf16.msra.mxu0 0
    %827 = vmatprep.mubr.bf16.mxu0 0
    %828 = vmatmul.mubr.bf16.gmra.mrb[0].mxu0 %v793
    %v829 = vpop.f32.mrb[0].mxu0
    %v830 = vadd.f32 %v780, %v829
    %v831 = vpop.f32.mrb[0].mxu0
    %v832 = vadd.f32 %v780, %v831
    %v833 = vpop.f32.mrb[0].mxu0
    %v834 = vadd.f32 %v785, %v833
    %v835 = vpop.f32.mrb[0].mxu0
    %v836 = vadd.f32 %v785, %v835
    %837 = vdwg.mxu0
    %838 = vmatprep.subr.bf16.mxu0 %v770
    %839 = vmatpush1.bf16.msra.mxu0 %v769
    %840 = vmatprep.subr.bf16.mxu0 %v774
    %841 = vmatpush1.bf16.msra.mxu0 %v773
    %842 = vmatprep.subr.bf16.mxu0 0
    %843 = vmatpush1.bf16.msra.mxu0 0
    %844 = vmatprep.subr.bf16.mxu0 0
    %845 = vmatpush1.bf16.msra.mxu0 0
    %846 = vmatprep.subr.bf16.mxu0 0
    %847 = vmatpush1.bf16.msra.mxu0 0
    %848 = vmatprep.subr.bf16.mxu0 0
    %849 = vmatpush1.bf16.msra.mxu0 0
    %850 = vmatprep.subr.bf16.mxu0 0
    %851 = vmatpush1.bf16.msra.mxu0 0
    %852 = vmatprep.subr.bf16.mxu0 0
    %853 = vmatpush1.bf16.msra.mxu0 0
    %854 = vmatprep.subr.bf16.mxu0 0
    %855 = vmatpush1.bf16.msra.mxu0 0
    %856 = vmatprep.subr.bf16.mxu0 0
    %857 = vmatpush1.bf16.msra.mxu0 0
    %858 = vmatprep.subr.bf16.mxu0 0
    %859 = vmatpush1.bf16.msra.mxu0 0
    %860 = vmatprep.subr.bf16.mxu0 0
    %861 = vmatpush1.bf16.msra.mxu0 0
    %862 = vmatprep.subr.bf16.mxu0 0
    %863 = vmatpush1.bf16.msra.mxu0 0
    %864 = vmatprep.subr.bf16.mxu0 0
    %865 = vmatpush1.bf16.msra.mxu0 0
    %866 = vmatprep.subr.bf16.mxu0 0
    %867 = vmatpush1.bf16.msra.mxu0 0
    %868 = vmatprep.subr.bf16.mxu0 0
    %869 = vmatpush1.bf16.msra.mxu0 0
    %870 = vmatprep.mubr.bf16.mxu0 0
    %871 = vmatmul.mubr.bf16.gmra.mrb[0].mxu0 %v793
    %v872 = vpop.f32.mrb[0].mxu0
    %v873 = vadd.f32 %v780, %v872
    %v874 = vpop.f32.mrb[0].mxu0
    %v875 = vadd.f32 %v780, %v874
    %v876 = vpop.f32.mrb[0].mxu0
    %v877 = vadd.f32 %v785, %v876
    %v878 = vpop.f32.mrb[0].mxu0
    %v879 = vadd.f32 %v785, %v878
    %880 = vdwg.mxu0
    %881 = vst [vmem:[#allocation5] sm:$0xff] %v830
    %882 = vst [vmem:[#allocation5 + $0x8] sm:$0xff] %v832
    %883 = vst [vmem:[#allocation5 + $0x10] sm:$0xff] %v873
    %884 = vst [vmem:[#allocation5 + $0x18] sm:$0xff] %v875
    %885 = vst [vmem:[#allocation5 + $0x20] sm:$0xff] %v834
    %886 = vst [vmem:[#allocation5 + $0x28] sm:$0xff] %v836
    %887 = vst [vmem:[#allocation5 + $0x30] sm:$0xff] %v877
    %888 = vst [vmem:[#allocation5 + $0x38] sm:$0xff] %v879
    // Predicated region
    $region26: #{tpu_custom_call.1} parent=1 // pred_check
      _
    $region27: #{tpu_custom_call.1} parent=1 // pred_check_branch
      %890 = sbr.rel (0) target = $region29
    $region28: #{tpu_custom_call.1} parent=1 // pred_region
      %s892 = ssub.s32 1024, 1024
      %893 = vsyncadd [#allocation4], %s892
      %s894 = sshll.u32 [#allocation5], 4
      %s895 = int_to_ptr.vmem [resolvable:$true] %s894
      %900 = dma.vmem_to_hbm [thread:$0]  %s895, 1024, %s5, [#allocation4], 512, 512, 32
    $region29: #{tpu_custom_call.1} parent=1 // pred_fallthru
      _
    // Predicated region
    $region30: #{tpu_custom_call.1} parent=1 // pred_check
      _
    $region31: #{tpu_custom_call.1} parent=1 // pred_check_branch
      %902 = sbr.rel (0) target = $region33
    $region32: #{tpu_custom_call.1} parent=1 // pred_region
      %903 = dma.done [#allocation4], 1024
    $region33: #{tpu_custom_call.1} parent=1 // pred_fallthru
      _
    %904 = vsyncpa [#allocation3], 1
    %905 = vsyncpa [#allocation4], 1

</llo_original>
